<compile_context>
chip_gen: v6e
topology: v6e:2x2x1
jax: 0.10.0
libtpu: 0.0.40
codegen_flags: <defaults>
</compile_context>

<pallas_src>
import functools
import math

import jax
import jax.numpy as jnp
from jax.experimental import pallas as pl
from jax.experimental.pallas import tpu as pltpu

NEG_INF = -1e30  # finite "minus infinity" so block-local row maxima stay finite


# ----------------------------------------------------------------------------- helpers
@functools.lru_cache(maxsize=None)
def _vmem_limit_bytes():
    """~Half of physical VMEM, capped at 64 MiB (v5e/v6e: 64 MiB, v7x: 32 MiB)."""
    limit = 32 * 1024 * 1024
    try:
        cap = int(pltpu.get_tpu_info().vmem_capacity_bytes)
        limit = max(32 * 1024 * 1024, min(64 * 1024 * 1024, cap // 2))
    except Exception:
        pass
    return limit


def _tile_and_pad(dim, pref):
    """Return (tile, padded_dim): full dim if small, else pref with padding to a multiple."""
    if dim <= pref:
        return dim, dim
    return pref, pl.cdiv(dim, pref) * pref


# ----------------------------------------------------------------------------- linear: y = x @ W^T + b
def _linear_kernel(x_ref, w_ref, b_ref, o_ref):
    # x_ref: (tm, H), w_ref: (tn, H) [PyTorch Linear layout], b_ref: (1, tn)
    y = jax.lax.dot_general(x_ref[...], w_ref[...], (((1,), (1,)), ((), ())),
                            preferred_element_type=jnp.float32)
    o_ref[...] = (y + b_ref[...]).astype(o_ref.dtype)


def linear_proj(x2d, weight, bias, *, tm_pref=256, tn_pref=256):
    """x2d: (M, H); weight: (N, H) PyTorch layout; bias: (N,). Returns (M, N)."""
    M, H = x2d.shape
    N = weight.shape[0]

    tm, Mp = _tile_and_pad(M, tm_pref)
    tn, Np = _tile_and_pad(N, tn_pref)
    if Mp != M:
        x2d = jnp.pad(x2d, ((0, Mp - M), (0, 0)))
    if Np != N:
        weight = jnp.pad(weight, ((0, Np - N), (0, 0)))
        bias = jnp.pad(bias, (0, Np - N))

    b2d = bias.reshape(1, Np)
    bytes_el = jnp.dtype(x2d.dtype).itemsize

    out = pl.pallas_call(
        _linear_kernel,
        out_shape=jax.ShapeDtypeStruct((Mp, Np), x2d.dtype),
        grid_spec=pltpu.PrefetchScalarGridSpec(
            num_scalar_prefetch=0,
            # Weight tiles on the slow axis: the (tn, H) weight block stays resident in VMEM
            # across the inner sweep over row tiles (no redundant weight re-DMA).
            grid=(Np // tn, Mp // tm),
            in_specs=[
                pl.BlockSpec((tm, H), lambda j, i: (i, 0)),
                pl.BlockSpec((tn, H), lambda j, i: (j, 0)),
                pl.BlockSpec((1, tn), lambda j, i: (0, j)),
            ],
            out_specs=pl.BlockSpec((tm, tn), lambda j, i: (i, j)),
        ),
        compiler_params=pltpu.CompilerParams(
            dimension_semantics=("parallel", "parallel"),
            vmem_limit_bytes=_vmem_limit_bytes()),
        cost_estimate=pl.CostEstimate(
            flops=2 * Mp * Np * H,
            transcendentals=0,
            bytes_accessed=bytes_el * (Mp * H + Np * H + Np + Mp * Np)),
    )(x2d, weight, b2d)

    if Mp != M or Np != N:
        out = out[:M, :N]
    return out


# ----------------------------------------------------------------------------- flash cross-attention
def _attn_kernel(*refs, nh, dh, scale, use_pos, use_mask):
    it = iter(refs)
    q_ref = next(it)                       # (1, tq, H)
    kv_ref = next(it)                      # (1, tk, 2H): [:, :, :H] = K, [:, :, H:] = V
    pk_ref = next(it) if use_pos else None     # (tk, dh)
    posb_ref = next(it) if use_pos else None   # (tq, tk) f32 = scale * Pq @ Pk^T
    bias_ref = next(it) if use_mask else None  # (1, 1, tk) f32 additive mask
    o_ref = next(it)                       # (1, tq, H) lane-dense output slab
    m_sc = next(it)                        # (nh, tq, 1) f32
    l_sc = next(it)                        # (nh, tq, 1) f32
    acc_sc = next(it)                      # (nh, tq, dh) f32

    ki = pl.program_id(2)
    H = nh * dh

    @pl.when(ki == 0)
    def _():
        m_sc[...] = jnp.full_like(m_sc, -jnp.inf)
        l_sc[...] = jnp.zeros_like(l_sc)
        acc_sc[...] = jnp.zeros_like(acc_sc)

    dims = (((1,), (1,)), ((), ()))  # contract head dim of both operands (Q @ K^T)

    for h in range(nh):                    # static unroll over heads (lane ranges)
        lo = h * dh
        qh = q_ref[0, :, lo:lo + dh] * scale           # scale folded into Q  (tq, dh)
        kh = kv_ref[0, :, lo:lo + dh]                  # (tk, dh)
        if use_pos:
            kh = kh + pk_ref[...].astype(kh.dtype)     # Q @ (K + Pk)^T covers the Q@Pk^T term
        s = jax.lax.dot_general(qh, kh, dims, preferred_element_type=jnp.float32)
        if use_pos:
            s = s + posb_ref[...]                      # precomputed scale * Pq @ Pk^T
        if use_mask:
            s = s + bias_ref[0]                        # (1, tk): 0 (keep) / NEG_INF (drop)

        # Online softmax update (f32 accumulators).
        m_prev = m_sc[h]
        m_new = jnp.maximum(m_prev, jnp.max(s, axis=-1, keepdims=True))
        alpha = jnp.exp(m_prev - m_new)
        p = jnp.exp(s - m_new)
        l_sc[h] = alpha * l_sc[h] + jnp.sum(p, axis=-1, keepdims=True)
        vh = kv_ref[0, :, H + lo:H + lo + dh]          # (tk, dh)
        acc_sc[h] = alpha * acc_sc[h] + jnp.dot(
            p.astype(vh.dtype), vh, preferred_element_type=jnp.float32)
        m_sc[h] = m_new

    @pl.when(ki == pl.num_programs(2) - 1)
    def _():
        for h in range(nh):
            lo = h * dh
            l = l_sc[h]
            inv = pl.reciprocal(l, approx=True)        # EUP path
            inv = inv * (2.0 - l * inv)                # one Newton step -> near-exact
            o_ref[0, :, lo:lo + dh] = (acc_sc[h] * inv).astype(o_ref.dtype)


def _flash_cross_attention(q, kv, pos_k, pos_bias, attention_mask, *, nh, dh, scale,
                           tq_pref=256, tk_pref=256):
    """q: (B, Sq, H); kv: (B, Sk, 2H) [K cols then V cols]; pos_k: (Sk, dh) or None;
    pos_bias: (Sq, Sk) f32 (= scale * Pq@Pk^T) or None; attention_mask: (B, Sk) 0/1 or None.
    Returns (B, Sq, H)."""
    B, Sq, H = q.shape
    _, Sk, _ = kv.shape
    use_pos = pos_k is not None

    tq, Sqp = _tile_and_pad(Sq, tq_pref)
    tk, Skp = _tile_and_pad(Sk, tk_pref)

    if Sqp != Sq:
        q = jnp.pad(q, ((0, 0), (0, Sqp - Sq), (0, 0)))
    if Skp != Sk:
        kv = jnp.pad(kv, ((0, 0), (0, Skp - Sk), (0, 0)))
    if use_pos:
        if Skp != Sk:
            pos_k = jnp.pad(pos_k, ((0, Skp - Sk), (0, 0)))
        if Sqp != Sq or Skp != Sk:
            pos_bias = jnp.pad(pos_bias, ((0, Sqp - Sq), (0, Skp - Sk)))

    # Mask bias is only materialized when there is a user mask or kv padding to hide.
    use_mask = (attention_mask is not None) or (Skp != Sk)
    bias = None
    if use_mask:
        if attention_mask is not None:
            bias = jnp.where(attention_mask == 0, NEG_INF, 0.0).astype(jnp.float32)
        else:
            bias = jnp.zeros((B, Sk), jnp.float32)
        if Skp != Sk:
            bias = jnp.pad(bias, ((0, 0), (0, Skp - Sk)), constant_values=NEG_INF)
        bias = bias.reshape(B, 1, Skp)

    kernel = functools.partial(_attn_kernel, nh=nh, dh=dh, scale=scale,
                               use_pos=use_pos, use_mask=use_mask)

    args = [q, kv]
    in_specs = [
        pl.BlockSpec((1, tq, H), lambda b, i, j: (b, i, 0)),
        pl.BlockSpec((1, tk, 2 * H), lambda b, i, j: (b, j, 0)),
    ]
    if use_pos:
        args += [pos_k, pos_bias]
        in_specs += [
            pl.BlockSpec((tk, dh), lambda b, i, j: (j, 0)),
            pl.BlockSpec((tq, tk), lambda b, i, j: (i, j)),
        ]
    if use_mask:
        args += [bias]
        in_specs += [pl.BlockSpec((1, 1, tk), lambda b, i, j: (b, 0, j))]

    bytes_el = jnp.dtype(q.dtype).itemsize
    n_qt = Sqp // tq

    out = pl.pallas_call(
        kernel,
        out_shape=jax.ShapeDtypeStruct((B, Sqp, H), q.dtype),
        grid_spec=pltpu.PrefetchScalarGridSpec(
            num_scalar_prefetch=0,
            grid=(B, Sqp // tq, Skp // tk),
            in_specs=in_specs,
            out_specs=pl.BlockSpec((1, tq, H), lambda b, i, j: (b, i, 0)),
            scratch_shapes=[
                pltpu.VMEM((nh, tq, 1), jnp.float32),    # running max per head
                pltpu.VMEM((nh, tq, 1), jnp.float32),    # running denom per head
                pltpu.VMEM((nh, tq, dh), jnp.float32),   # output accumulator per head
            ],
        ),
        compiler_params=pltpu.CompilerParams(
            dimension_semantics=("parallel", "parallel", "arbitrary"),
            vmem_limit_bytes=_vmem_limit_bytes()),
        cost_estimate=pl.CostEstimate(
            flops=4 * B * Sqp * Skp * H,
            transcendentals=B * nh * Sqp * Skp,
            bytes_accessed=bytes_el * (B * Sqp * H          # Q in
                                       + B * Skp * 2 * H * n_qt  # KV per q-tile
                                       + B * Sqp * H)),     # O out
    )(*args)

    if Sqp != Sq:
        out = out[:, :Sq, :]
    return out


# ----------------------------------------------------------------------------- full module forward
def bert_attention(hidden_states, context, wq, bq, wk, bk, wv, bv, *,
                   num_attention_heads, abs_pos_emb=None, attention_mask=None):
    """Forward pass of BertAttention (cross-attention).

    hidden_states: (B, Sq, H)  -> queries
    context:       (B, Sk, H)  -> keys / values
    wq/wk/wv: (H, H) PyTorch Linear layout; bq/bk/bv: (H,)
    abs_pos_emb: (>=max(Sq,Sk), head_dim) or None
    attention_mask: (B, Sk) of 0/1 or None
    Returns: (B, Sq, H)
    """
    B, Sq, H = hidden_states.shape
    _, Sk, _ = context.shape
    nh = num_attention_heads
    dh = H // nh
    scale = 1.0 / math.sqrt(dh)

    # Q projection; K and V fused into a single projection (one pass over `context`).
    q2d = linear_proj(hidden_states.reshape(B * Sq, H), wq, bq)
    w_kv = jnp.concatenate([wk, wv], axis=0)      # (2H, H): output cols [0:H)=K, [H:2H)=V
    b_kv = jnp.concatenate([bk, bv], axis=0)
    kv2d = linear_proj(context.reshape(B * Sk, H), w_kv, b_kv)

    q = q2d.reshape(B, Sq, H)        # heads stay as lane-ranges; no head transposes
    kv = kv2d.reshape(B, Sk, 2 * H)

    if abs_pos_emb is not None:
        pos_q = abs_pos_emb[:Sq].astype(jnp.float32)
        pos_kf = abs_pos_emb[:Sk].astype(jnp.float32)
        # (Q+Pq)@Pk^T = Q@Pk^T + Pq@Pk^T; the Pq@Pk^T part is query/key-position only,
        # computed once here (tiny) and streamed as a (tq, tk) bias tile.
        pos_bias = (scale * jnp.dot(pos_q, pos_kf.T)).astype(jnp.float32)
        pos_k = abs_pos_emb[:Sk].astype(q.dtype)
    else:
        pos_bias = None
        pos_k = None

    return _flash_cross_attention(q, kv, pos_k, pos_bias, attention_mask,
                                  nh=nh, dh=dh, scale=scale)


# ----------------------------------------------------------------------------- pure-JAX reference
def reference_bert_attention(hidden_states, context, wq, bq, wk, bk, wv, bv,
                             num_attention_heads, abs_pos_emb=None, attention_mask=None):
    B, Sq, H = hidden_states.shape
    _, Sk, _ = context.shape
    nh = num_attention_heads
    dh = H // nh

    q = hidden_states @ wq.T + bq
    k = context @ wk.T + bk
    v = context @ wv.T + bv

    def split(x, S):
        return jnp.transpose(x.reshape(B, S, nh, dh), (0, 2, 1, 3))

    ql, kl, vl = split(q, Sq), split(k, Sk), split(v, Sk)
    scores = jnp.einsum("bhqd,bhkd->bhqk", ql, kl)
    if abs_pos_emb is not None:
        pos_k = abs_pos_emb[:Sk]
        pos_q = abs_pos_emb[:Sq]
        pos_scores = jnp.einsum("bhqd,kd->bhqk", ql + pos_q[None, None], pos_k)
        scores = (scores + pos_scores) / math.sqrt(dh)
    else:
        scores = scores / math.sqrt(dh)
    if attention_mask is not None:
        scores = scores + jnp.where(attention_mask == 0, -jnp.inf, 0.0)[:, None, None, :]
    probs = jax.nn.softmax(scores, axis=-1)
    ctx = jnp.einsum("bhqk,bhkd->bhqd", probs, vl)
    return jnp.transpose(ctx, (0, 2, 1, 3)).reshape(B, Sq, H)


if __name__ == "__main__":
    # Small config: hidden=32, heads=4 (head_dim=8), batch=2, q-seq=8, kv-seq=16.
    B, Sq, Sk, H, NH = 2, 8, 16, 32, 4
    DH = H // NH

    key = jax.random.PRNGKey(0)
    (k_hs, k_ctx, k_wq, k_bq, k_wk, k_bk,
     k_wv, k_bv, k_pos, k_mask) = jax.random.split(key, 10)

    bound = 1.0 / math.sqrt(H)
    wq = jax.random.uniform(k_wq, (H, H), jnp.float32, -bound, bound)
    bq = jax.random.uniform(k_bq, (H,), jnp.float32, -bound, bound)
    wk = jax.random.uniform(k_wk, (H, H), jnp.float32, -bound, bound)
    bk = jax.random.uniform(k_bk, (H,), jnp.float32, -bound, bound)
    wv = jax.random.uniform(k_wv, (H, H), jnp.float32, -bound, bound)
    bv = jax.random.uniform(k_bv, (H,), jnp.float32, -bound, bound)
    abs_pos_emb = jax.random.normal(k_pos, (512, DH), jnp.float32)

    hidden_states = jax.random.normal(k_hs, (B, Sq, H), jnp.float32)
    context = jax.random.normal(k_ctx, (B, Sk, H), jnp.float32)
    attention_mask = (jax.random.uniform(k_mask, (B, Sk)) > 0.3).astype(jnp.float32)
    attention_mask = attention_mask.at[:, 0].set(1.0)  # >=1 valid key per batch row

    # Full path: abs pos emb + attention mask.
    out = bert_attention(hidden_states, context, wq, bq, wk, bk, wv, bv,
                         num_attention_heads=NH, abs_pos_emb=abs_pos_emb,
                         attention_mask=attention_mask)
    out = jax.block_until_ready(out)
    ref = reference_bert_attention(hidden_states, context, wq, bq, wk, bk, wv, bv,
                                   NH, abs_pos_emb=abs_pos_emb,
                                   attention_mask=attention_mask)
    assert out.shape == (B, Sq, H)
    assert jnp.allclose(out, ref, atol=2e-3, rtol=2e-3)

    # No pos emb, no mask path.
    out2 = bert_attention(hidden_states, context, wq, bq, wk, bk, wv, bv,
                          num_attention_heads=NH)
    out2 = jax.block_until_ready(out2)
    ref2 = reference_bert_attention(hidden_states, context, wq, bq, wk, bk, wv, bv, NH)
    assert jnp.allclose(out2, ref2, atol=2e-3, rtol=2e-3)

    print("KERNEL_OK")
</pallas_src>

<mosaic_0001>
module attributes {stable_mosaic.version = 11 : i64} {
  func.func @_linear_kernel(%arg0: i32, %arg1: i32, %arg2: memref<16x32xf32, #tpu.memory_space<vmem>>, %arg3: memref<32x32xf32, #tpu.memory_space<vmem>>, %arg4: memref<1x32xf32, #tpu.memory_space<vmem>>, %arg5: memref<16x32xf32, #tpu.memory_space<vmem>>) attributes {dimension_semantics = [#tpu.dimension_semantics<parallel>, #tpu.dimension_semantics<parallel>], iteration_bounds = array<i64: 1, 1>, scalar_prefetch = 0 : i64, scratch_operands = 0 : i64, tpu.core_type = #tpu.core_type<tc>, window_params = [{transform_indices = @transform_0, window_bounds = array<i64: 16, 32>}, {transform_indices = @transform_1, window_bounds = array<i64: 32, 32>}, {transform_indices = @transform_2, window_bounds = array<i64: 1, 32>}, {transform_indices = @transform_3, window_bounds = array<i64: 16, 32>}]} {
    %c0 = arith.constant 0 : index
    %c0_0 = arith.constant 0 : index
    %0 = vector.load %arg2[%c0, %c0_0] : memref<16x32xf32, #tpu.memory_space<vmem>>, vector<16x32xf32>
    %c0_1 = arith.constant 0 : index
    %c0_2 = arith.constant 0 : index
    %1 = vector.load %arg3[%c0_1, %c0_2] : memref<32x32xf32, #tpu.memory_space<vmem>>, vector<32x32xf32>
    %cst = arith.constant dense<0.000000e+00> : vector<16x32xf32>
    %2 = tpu.matmul %0, %1, %cst {dimension_numbers = #tpu.dot_dimension_numbers<[1], [1], [0], [0], [0, 0, 1, 0], [], []>} : vector<16x32xf32>, vector<32x32xf32>, vector<16x32xf32> -> vector<16x32xf32>
    %c0_3 = arith.constant 0 : index
    %c0_4 = arith.constant 0 : index
    %3 = vector.load %arg4[%c0_3, %c0_4] : memref<1x32xf32, #tpu.memory_space<vmem>>, vector<1x32xf32>
    %4 = vector.broadcast %3 : vector<1x32xf32> to vector<16x32xf32>
    %5 = arith.addf %2, %4 : vector<16x32xf32>
    %c0_5 = arith.constant 0 : index
    %c0_6 = arith.constant 0 : index
    %6 = vector.load %arg5[%c0_5, %c0_6] : memref<16x32xf32, #tpu.memory_space<vmem>>, vector<16x32xf32>
    tpu.vector_store %arg5[%c0_5, %c0_6], %5 {strides = array<i32>} : memref<16x32xf32, #tpu.memory_space<vmem>>, vector<16x32xf32>,
    return
  }
  func.func @transform_0(%arg0: i32, %arg1: i32) -> (i32, i32) {
    %c0_i32 = arith.constant 0 : i32
    %c0_i32_0 = arith.constant 0 : i32
    return %arg1, %c0_i32 : i32, i32
  }
  func.func @transform_1(%arg0: i32, %arg1: i32) -> (i32, i32) {
    %c0_i32 = arith.constant 0 : i32
    %c0_i32_0 = arith.constant 0 : i32
    return %arg0, %c0_i32 : i32, i32
  }
  func.func @transform_2(%arg0: i32, %arg1: i32) -> (i32, i32) {
    %c0_i32 = arith.constant 0 : i32
    %c0_i32_0 = arith.constant 0 : i32
    return %c0_i32, %arg0 : i32, i32
  }
  func.func @transform_3(%arg0: i32, %arg1: i32) -> (i32, i32) {
    %c0_i32 = arith.constant 0 : i32
    return %arg1, %arg0 : i32, i32
  }
}

</mosaic_0001>

<llo_original>
// kernel: tpu_custom_call.1
$region0: #{tpu_custom_call.1}
  #allocation0 [shape = 'u32[]', space=smem, size = 0x4, offset = 0x4, fixed_abs, tag = 'smem constant byte address 0x4 - core index']
  #allocation1 [shape = 'u32[144,128]{1,0:T(1,128)}', space=vmem, size = 0x12000, scoped, tag = 'internal scratch']
  %s0 = inlined_call_operand.hbm [shape: f32[16,32], index: 0, kind: input, shape index: {}]
  %s1 = inlined_call_operand.hbm [shape: f32[32,32], index: 1, kind: input, shape index: {}]
  %s2 = inlined_call_operand.vmem [shape: f32[1,32], index: 2, kind: input, shape index: {}]
  %s3 = inlined_call_operand.hbm [shape: f32[16,32], index: 3, kind: output, shape index: {}]
  %s4 = sld [smem:[#allocation0]]
  $region30: #{tpu_custom_call.1} parent=0
    _
  %s6 = ssub.s32 1, %s4
  %s7 = scalar_select 0, %s6, %s4
  $region1: #{tpu_custom_call.1} parent=0
    #allocation2 [shape = 'u8[8192]{0}', space=vmem, size = 0x2000, scoped, tag = 'input window, operand 0, single buffered']
    #allocation3 [shape = 's32[1]{0}', space=sflag, size = 0x4, scoped, tag = 'scoped memory for tpu_custom_call.1']
    #allocation4 [shape = 's32[1]{0}', space=sflag, size = 0x4, scoped, tag = 'scoped memory for tpu_custom_call.1']
    #allocation5 [shape = 'u8[16384]{0}', space=vmem, size = 0x4000, scoped, tag = 'input window, operand 1, single buffered']
    #allocation6 [shape = 's32[1]{0}', space=sflag, size = 0x4, scoped, tag = 'scoped memory for tpu_custom_call.1']
    #allocation7 [shape = 'u8[8192]{0}', space=vmem, size = 0x2000, scoped, tag = 'output window, operand 0, single buffered']
    %8 = vsyncpa [#allocation3], 0
    %9 = vsyncpa [#allocation6], 0
    %10 = vsyncpa [#allocation4], 0
    // Predicated region
    $region2: #{tpu_custom_call.1} parent=1 // pred_check
      _
    $region3: #{tpu_custom_call.1} parent=1 // pred_check_branch
      %12 = sbr.rel (0) target = $region5
    $region4: #{tpu_custom_call.1} parent=1 // pred_region
      %s14 = ssub.s32 256, 256
      %15 = vsyncadd [#allocation3], %s14
      %s16 = sshll.u32 [#allocation2], 4
      %s17 = int_to_ptr.vmem [resolvable:$true] %s16
      %22 = dma.hbm_to_vmem [thread:$0]  %s0, 256, %s17, [#allocation3], 128, 128, 8
    $region5: #{tpu_custom_call.1} parent=1 // pred_fallthru
      _
    // Predicated region
    $region6: #{tpu_custom_call.1} parent=1 // pred_check
      _
    $region7: #{tpu_custom_call.1} parent=1 // pred_check_branch
      %24 = sbr.rel (0) target = $region9
    $region8: #{tpu_custom_call.1} parent=1 // pred_region
      %s26 = ssub.s32 512, 512
      %27 = vsyncadd [#allocation6], %s26
      %s28 = sshll.u32 [#allocation5], 4
      %s29 = int_to_ptr.vmem [resolvable:$true] %s28
      %34 = dma.hbm_to_vmem [thread:$0]  %s1, 512, %s29, [#allocation6], 128, 128, 8
    $region9: #{tpu_custom_call.1} parent=1 // pred_fallthru
      _
    // Predicated region
    $region10: #{tpu_custom_call.1} parent=1 // pred_check
      _
    $region11: #{tpu_custom_call.1} parent=1 // pred_check_branch
      %36 = sbr.rel (0) target = $region13
    $region12: #{tpu_custom_call.1} parent=1 // pred_region
      _
    $region13: #{tpu_custom_call.1} parent=1 // pred_fallthru
      _
    // Predicated region
    $region14: #{tpu_custom_call.1} parent=1 // pred_check
      _
    $region15: #{tpu_custom_call.1} parent=1 // pred_check_branch
      %38 = sbr.rel (0) target = $region17
    $region16: #{tpu_custom_call.1} parent=1 // pred_region
      %39 = dma.done [#allocation3], 256
    $region17: #{tpu_custom_call.1} parent=1 // pred_fallthru
      _
    // Predicated region
    $region18: #{tpu_custom_call.1} parent=1 // pred_check
      _
    $region19: #{tpu_custom_call.1} parent=1 // pred_check_branch
      %41 = sbr.rel (0) target = $region21
    $region20: #{tpu_custom_call.1} parent=1 // pred_region
      %42 = dma.done [#allocation6], 512
    $region21: #{tpu_custom_call.1} parent=1 // pred_fallthru
      _
    %v43 = vld [vmem:[#allocation2] sm:$0xff]
    %v44 = vld [vmem:[#allocation2 + $0x8] sm:$0xff]
    %v45 = vld [vmem:[#allocation5] sm:$0xff]
    %v46 = vld [vmem:[#allocation5 + $0x8] sm:$0xff]
    %v47 = vld [vmem:[#allocation5 + $0x10] sm:$0xff]
    %v48 = vld [vmem:[#allocation5 + $0x18] sm:$0xff]
    %v49 = vld [vmem:[%s2] sm:$0x1]
    %v51 = vlaneseq
    %v52 = vshrl.u32 %v51, 7
    %v53 = vsub.s32 0, %v52
    %v54 = vrot.slane %v49, %v53
    %vm56 = vcmask 261120
    %v58 = vsel %vm56, %v43, 0
    %v61 = vsel %vm56, %v44, 0
    %v64 = vsel %vm56, %v45, 0
    %v67 = vsel %vm56, %v46, 0
    %v70 = vsel %vm56, %v47, 0
    %v73 = vsel %vm56, %v48, 0
    %75 = vmatprep.subr.mxu0 0.0
    %76 = vmatpush1.xpose.msra.mxu0 0.0
    %77 = vmatprep.subr.mxu0 0.0
    %78 = vmatpush1.xpose.msra.mxu0 0.0
    %79 = vmatprep.subr.mxu0 0.0
    %80 = vmatpush1.xpose.msra.mxu0 0.0
    %81 = vmatprep.subr.mxu0 0.0
    %82 = vmatpush1.xpose.msra.mxu0 0.0
    %83 = vmatprep.subr.mxu0 0.0
    %84 = vmatpush1.xpose.msra.mxu0 0.0
    %85 = vmatprep.subr.mxu0 0.0
    %86 = vmatpush1.xpose.msra.mxu0 0.0
    %87 = vmatprep.subr.mxu0 0.0
    %88 = vmatpush1.xpose.msra.mxu0 0.0
    %89 = vmatprep.subr.mxu0 0.0
    %90 = vmatpush1.xpose.msra.mxu0 0.0
    %91 = vmatprep.subr.mxu0 0.0
    %92 = vmatpush1.xpose.msra.mxu0 0.0
    %93 = vmatprep.subr.mxu0 0.0
    %94 = vmatpush1.xpose.msra.mxu0 0.0
    %95 = vmatprep.subr.mxu0 0.0
    %96 = vmatpush1.xpose.msra.mxu0 0.0
    %97 = vmatprep.subr.mxu0 0.0
    %98 = vmatpush1.xpose.msra.mxu0 0.0
    %99 = vmatprep.subr.mxu0 0.0
    %100 = vmatpush1.xpose.msra.mxu0 %v73
    %101 = vmatprep.subr.mxu0 0.0
    %102 = vmatpush1.xpose.msra.mxu0 %v70
    %103 = vmatprep.subr.mxu0 0.0
    %104 = vmatpush1.xpose.msra.mxu0 %v67
    %105 = vmatprep.subr.mxu0 0.0
    %106 = vmatpush1.xpose.msra.mxu0 %v64
    %107 = vmatprep.subr.mxu0 0.0
    %108 = vmatpush2.xpose.msra.mxu0 0.0
    %109 = vmatprep.subr.mxu0 0.0
    %110 = vmatpush2.xpose.msra.mxu0 0.0
    %111 = vmatprep.subr.mxu0 0.0
    %112 = vmatpush2.xpose.msra.mxu0 0.0
    %113 = vmatprep.subr.mxu0 0.0
    %114 = vmatpush2.xpose.msra.mxu0 0.0
    %115 = vmatprep.subr.mxu0 0.0
    %116 = vmatpush2.xpose.msra.mxu0 0.0
    %117 = vmatprep.subr.mxu0 0.0
    %118 = vmatpush2.xpose.msra.mxu0 0.0
    %119 = vmatprep.subr.mxu0 0.0
    %120 = vmatpush2.xpose.msra.mxu0 0.0
    %121 = vmatprep.subr.mxu0 0.0
    %122 = vmatpush2.xpose.msra.mxu0 0.0
    %123 = vmatprep.subr.mxu0 0.0
    %124 = vmatpush2.xpose.msra.mxu0 0.0
    %125 = vmatprep.subr.mxu0 0.0
    %126 = vmatpush2.xpose.msra.mxu0 0.0
    %127 = vmatprep.subr.mxu0 0.0
    %128 = vmatpush2.xpose.msra.mxu0 0.0
    %129 = vmatprep.subr.mxu0 0.0
    %130 = vmatpush2.xpose.msra.mxu0 0.0
    %131 = vmatprep.subr.mxu0 0.0
    %132 = vmatpush2.xpose.msra.mxu0 0.0
    %133 = vmatprep.subr.mxu0 0.0
    %134 = vmatpush2.xpose.msra.mxu0 0.0
    %135 = vmatprep.subr.mxu0 0.0
    %136 = vmatpush2.xpose.msra.mxu0 0.0
    %137 = vmatprep.subr.mxu0 0.0
    %138 = vmatpush2.xpose.msra.mxu0 0.0
    %139 = vmatprep.mubr.f32.mxu0 0.0
    %140 = vmatmul.mubr.f32.gmra.mxu0 %v58
    %v141 = vpop.f32.mrf.mxu0
    %v142 = vadd.f32 %v54, %v141
    %v143 = vpop.f32.mrf.mxu0
    %144 = vmatprep.mubr.f32.mxu0 0.0
    %145 = vmatmul.mubr.f32.gmra.mxu0 %v61
    %v146 = vpop.f32.mrf.mxu0
    %v147 = vadd.f32 %v54, %v146
    %v148 = vpop.f32.mrf.mxu0
    %149 = vdwg.mxu0
    %150 = vst.msk [vmem:[#allocation7] sm:$0xff] %vm56, %v142
    %151 = vst.msk [vmem:[#allocation7 + $0x8] sm:$0xff] %vm56, %v147
    // Predicated region
    $region22: #{tpu_custom_call.1} parent=1 // pred_check
      _
    $region23: #{tpu_custom_call.1} parent=1 // pred_check_branch
      %153 = sbr.rel (0) target = $region25
    $region24: #{tpu_custom_call.1} parent=1 // pred_region
      %s155 = ssub.s32 256, 256
      %156 = vsyncadd [#allocation4], %s155
      %s157 = sshll.u32 [#allocation7], 4
      %s158 = int_to_ptr.vmem [resolvable:$true] %s157
      %163 = dma.vmem_to_hbm [thread:$0]  %s158, 256, %s3, [#allocation4], 128, 128, 8
    $region25: #{tpu_custom_call.1} parent=1 // pred_fallthru
      _
    // Predicated region
    $region26: #{tpu_custom_call.1} parent=1 // pred_check
      _
    $region27: #{tpu_custom_call.1} parent=1 // pred_check_branch
      %165 = sbr.rel (0) target = $region29
    $region28: #{tpu_custom_call.1} parent=1 // pred_region
      %166 = dma.done [#allocation4], 256
    $region29: #{tpu_custom_call.1} parent=1 // pred_fallthru
      _
    %167 = vsyncpa [#allocation3], 1
    %168 = vsyncpa [#allocation6], 1
    %169 = vsyncpa [#allocation4], 1

</llo_original>
